<compile_context>
chip_gen: v5e
topology: v5e:2x2
jax: 0.10.0
libtpu: 0.0.40
codegen_flags: <defaults>
</compile_context>

<pallas_src>
import math

import jax
import jax.numpy as jnp
from jax.experimental import pallas as pl
from jax.experimental.pallas import tpu as pltpu

_LANES = 128
_SUBLANES = 8
_DEFAULT_TILE_ROWS = 2048   # packed rows per grid step (= 16384 samples at P=8)
_MIN_GRID_STEPS = 4         # >= 2 steps per TensorCore on v7x megacore


def _mlp_kernel(x_ref, w1_ref, b1_ref, w2_ref, b2_ref, w3_ref, b3_ref, o_ref):
    """One packed-row tile: (tile_r, P*in_f) -> (tile_r, P*out_f)."""
    xb = x_ref[...].astype(jnp.bfloat16)
    h1 = jnp.dot(xb, w1_ref[...], preferred_element_type=jnp.float32) + b1_ref[...]
    h1 = jnp.maximum(h1, 0.0)
    # dropout -> identity (eval mode)
    h2 = jnp.dot(h1.astype(jnp.bfloat16), w2_ref[...],
                 preferred_element_type=jnp.float32) + b2_ref[...]
    h2 = jnp.maximum(h2, 0.0)
    out = jnp.dot(h2.astype(jnp.bfloat16), w3_ref[...],
                  preferred_element_type=jnp.float32) + b3_ref[...]
    o_ref[...] = out.astype(o_ref.dtype)


def _vmem_cap_bytes():
    """3/4 of physical per-core VMEM (v7x: 64 MiB -> 48 MiB; v5e/v6e: 96 MiB)."""
    try:
        phys = int(pltpu.get_tpu_info().vmem_capacity_bytes)
    except Exception:
        phys = 64 * 1024 * 1024
    return (phys * 3) // 4


def _pick_tile_rows(rows, cap=_DEFAULT_TILE_ROWS, min_steps=_MIN_GRID_STEPS):
    """Sublane-aligned packed-row tile, capped, with >= min_steps grid steps."""
    if rows <= _SUBLANES:
        return rows                                   # single tiny block
    tile = min(cap, (rows // _SUBLANES) * _SUBLANES)
    per_step = -(-rows // min_steps)                  # ceil(rows / min_steps)
    per_step = -(-per_step // _SUBLANES) * _SUBLANES  # round up to sublane multiple
    return max(_SUBLANES, min(tile, per_step))


def pack_params(params, *, weight_dtype=jnp.bfloat16):
    """Build P-way block-diagonal replicated weights once (reused every call)."""
    w1, b1, w2, b2, w3, b3 = params          # PyTorch layout: W (out, in), b (out,)
    hid, in_f = w1.shape
    P = max(1, _LANES // in_f)               # samples packed per 128-lane row
    # Keep the replicated hidden weight small (resident in VMEM).
    while P > 1 and (P * hid) * (P * hid) * 2 > (2 << 20):
        P //= 2

    def bd(w):                                # (out, in) -> block-diag (P*in, P*out)
        return jnp.kron(jnp.eye(P, dtype=w.dtype), w.T).astype(weight_dtype)

    return {
        "P": P,
        "w1": bd(w1), "b1": jnp.tile(b1, P).reshape(1, -1).astype(jnp.float32),
        "w2": bd(w2), "b2": jnp.tile(b2, P).reshape(1, -1).astype(jnp.float32),
        "w3": bd(w3), "b3": jnp.tile(b3, P).reshape(1, -1).astype(jnp.float32),
    }


def backbone_forward(x, packed, *, tile_rows=None):
    """Fused 3-layer MLP forward.  x: (B, in_features) -> (B, out_features)."""
    P = packed["P"]
    w1p, b1p = packed["w1"], packed["b1"]
    w2p, b2p = packed["w2"], packed["b2"]
    w3p, b3p = packed["w3"], packed["b3"]
    B, in_f = x.shape
    assert w1p.shape[0] == P * in_f, "packed params do not match x feature dim"
    hid_p = w1p.shape[1]
    out_fp = w3p.shape[1]
    out_f = out_fp // P

    # Pad B to a multiple of P (extra HBM pass only in the ragged case), then
    # view as packed rows -- a free, contiguous reshape.
    B_pad = -(-B // P) * P
    xp = x if B_pad == B else jnp.pad(x, ((0, B_pad - B), (0, 0)))
    xp = xp.reshape(B_pad // P, P * in_f)
    R = xp.shape[0]

    if tile_rows is None:
        tile_rows = _pick_tile_rows(R)
    grid = (pl.cdiv(R, tile_rows),)

    # Scoped-VMEM budget: double-buffered x/out tiles + packed weights +
    # f32/bf16 activation temporaries, 2x headroom, capped below physical VMEM.
    x_b = x.dtype.itemsize
    w_bytes = sum(int(a.size) * a.dtype.itemsize
                  for a in (w1p, w2p, w3p, b1p, b2p, b3p))
    est = (2 * tile_rows * P * in_f * x_b        # x tile (double buffered)
           + tile_rows * P * in_f * 2            # bf16 cast of x tile
           + 2 * tile_rows * hid_p * (4 + 2)     # h1, h2 (f32 + bf16 copies)
           + 2 * tile_rows * out_fp * 4          # out tile (double buffered)
           + 2 * w_bytes)
    vmem_limit = int(min(_vmem_cap_bytes(), max(2 * est, 16 * 1024 * 1024)))

    out_p = pl.pallas_call(
        _mlp_kernel,
        out_shape=jax.ShapeDtypeStruct((R, out_fp), x.dtype),
        grid_spec=pltpu.PrefetchScalarGridSpec(
            num_scalar_prefetch=0,
            grid=grid,
            in_specs=[
                pl.BlockSpec((tile_rows, P * in_f), lambda i: (i, 0)),  # x tile
                pl.BlockSpec(w1p.shape, lambda i: (0, 0)),              # W1' (resident)
                pl.BlockSpec(b1p.shape, lambda i: (0, 0)),              # b1'
                pl.BlockSpec(w2p.shape, lambda i: (0, 0)),              # W2'
                pl.BlockSpec(b2p.shape, lambda i: (0, 0)),              # b2'
                pl.BlockSpec(w3p.shape, lambda i: (0, 0)),              # W3'
                pl.BlockSpec(b3p.shape, lambda i: (0, 0)),              # b3'
            ],
            out_specs=pl.BlockSpec((tile_rows, out_fp), lambda i: (i, 0)),
        ),
        compiler_params=pltpu.CompilerParams(
            dimension_semantics=("parallel",),
            vmem_limit_bytes=vmem_limit,
        ),
    )(xp, w1p, b1p, w2p, b2p, w3p, b3p)

    out = out_p.reshape(B_pad, out_f)   # free reshape back to sample-major
    return out if B_pad == B else out[:B]


def init_params(key, in_features, hidden_dimensions, out_features):
    """nn.Linear-style U(-1/sqrt(fan_in), 1/sqrt(fan_in)); W (out, in), b (out,)."""
    ks = jax.random.split(key, 6)

    def linear(kw, kb, fan_in, fan_out):
        bound = 1.0 / math.sqrt(fan_in)
        w = jax.random.uniform(kw, (fan_out, fan_in), jnp.float32, -bound, bound)
        b = jax.random.uniform(kb, (fan_out,), jnp.float32, -bound, bound)
        return w, b

    w1, b1 = linear(ks[0], ks[1], in_features, hidden_dimensions)
    w2, b2 = linear(ks[2], ks[3], hidden_dimensions, hidden_dimensions)
    w3, b3 = linear(ks[4], ks[5], hidden_dimensions, out_features)
    return (w1, b1, w2, b2, w3, b3)


def reference_forward(x, params):
    w1, b1, w2, b2, w3, b3 = params
    h1 = jnp.maximum(x @ w1.T + b1, 0.0)
    h2 = jnp.maximum(h1 @ w2.T + b2, 0.0)
    return h2 @ w3.T + b3


if __name__ == "__main__":
    key = jax.random.PRNGKey(0)
    k_x, k_x2, k_x3, k_p = jax.random.split(key, 4)

    # PPO MLP over flat observations.
    in_features = 16
    hidden_dimensions = 32
    out_features = 4
    dropout = 0.2  # identity at inference

    params = init_params(k_p, in_features, hidden_dimensions, out_features)
    packed = pack_params(params)   # P = 8 samples per 128-lane row

    # bf16 MXU operands vs f32 reference -> loosened tolerance.
    tol = dict(atol=5e-2, rtol=5e-2)

    # Multi-tile path: B=256 -> 32 packed rows -> 4 grid steps of 8 rows.
    x = jax.random.normal(k_x, (256, in_features), jnp.float32)
    out = jax.block_until_ready(backbone_forward(x, packed))
    ref = reference_forward(x, params)
    assert out.shape == (256, out_features)
    assert jnp.allclose(out, ref, **tol), "mismatch vs reference (tiled)"

    # Tiny-batch path: single (1, 128) block.
    x_small = jax.random.normal(k_x2, (8, in_features), jnp.float32)
    out_small = jax.block_until_ready(backbone_forward(x_small, packed))
    assert out_small.shape == (8, out_features)
    assert jnp.allclose(out_small, reference_forward(x_small, params), **tol), \
        "mismatch vs reference (small batch)"

    # Ragged batch: B % 8 != 0 (pad path) and a masked partial last tile.
    x_rag = jax.random.normal(k_x3, (300, in_features), jnp.float32)
    out_rag = jax.block_until_ready(backbone_forward(x_rag, packed))
    assert out_rag.shape == (300, out_features)
    assert jnp.allclose(out_rag, reference_forward(x_rag, params), **tol), \
        "mismatch vs reference (ragged batch)"

    print("KERNEL_OK")
</pallas_src>

<mosaic_0001>
module attributes {stable_mosaic.version = 11 : i64} {
  func.func @_mlp_kernel(%arg0: i32, %arg1: memref<8x128xf32, #tpu.memory_space<vmem>>, %arg2: memref<128x256xbf16, #tpu.memory_space<vmem>>, %arg3: memref<1x256xf32, #tpu.memory_space<vmem>>, %arg4: memref<256x256xbf16, #tpu.memory_space<vmem>>, %arg5: memref<1x256xf32, #tpu.memory_space<vmem>>, %arg6: memref<256x32xbf16, #tpu.memory_space<vmem>>, %arg7: memref<1x32xf32, #tpu.memory_space<vmem>>, %arg8: memref<8x32xf32, #tpu.memory_space<vmem>>) attributes {dimension_semantics = [#tpu.dimension_semantics<parallel>], iteration_bounds = array<i64: 4>, scalar_prefetch = 0 : i64, scratch_operands = 0 : i64, tpu.core_type = #tpu.core_type<tc>, window_params = [{transform_indices = @transform_0, window_bounds = array<i64: 8, 128>}, {pipeline_mode = #tpu.pipeline_mode<synchronous>, transform_indices = @transform_1, window_bounds = array<i64: 128, 256>}, {pipeline_mode = #tpu.pipeline_mode<synchronous>, transform_indices = @transform_2, window_bounds = array<i64: 1, 256>}, {pipeline_mode = #tpu.pipeline_mode<synchronous>, transform_indices = @transform_3, window_bounds = array<i64: 256, 256>}, {pipeline_mode = #tpu.pipeline_mode<synchronous>, transform_indices = @transform_4, window_bounds = array<i64: 1, 256>}, {pipeline_mode = #tpu.pipeline_mode<synchronous>, transform_indices = @transform_5, window_bounds = array<i64: 256, 32>}, {pipeline_mode = #tpu.pipeline_mode<synchronous>, transform_indices = @transform_6, window_bounds = array<i64: 1, 32>}, {transform_indices = @transform_7, window_bounds = array<i64: 8, 32>}]} {
    %c0 = arith.constant 0 : index
    %c0_0 = arith.constant 0 : index
    %0 = vector.load %arg1[%c0, %c0_0] : memref<8x128xf32, #tpu.memory_space<vmem>>, vector<8x128xf32>
    %1 = arith.truncf %0 : vector<8x128xf32> to vector<8x128xbf16>
    %c0_1 = arith.constant 0 : index
    %c0_2 = arith.constant 0 : index
    %2 = vector.load %arg2[%c0_1, %c0_2] : memref<128x256xbf16, #tpu.memory_space<vmem>>, vector<128x256xbf16>
    %cst = arith.constant dense<0.000000e+00> : vector<8x256xf32>
    %3 = tpu.matmul %1, %2, %cst {dimension_numbers = #tpu.dot_dimension_numbers<[1], [0], [0], [1], [0, 0, 1, 1], [], []>} : vector<8x128xbf16>, vector<128x256xbf16>, vector<8x256xf32> -> vector<8x256xf32>
    %c0_3 = arith.constant 0 : index
    %c0_4 = arith.constant 0 : index
    %4 = vector.load %arg3[%c0_3, %c0_4] : memref<1x256xf32, #tpu.memory_space<vmem>>, vector<1x256xf32>
    %5 = vector.broadcast %4 : vector<1x256xf32> to vector<8x256xf32>
    %6 = arith.addf %3, %5 : vector<8x256xf32>
    %cst_5 = arith.constant 0.000000e+00 : f32
    %7 = vector.broadcast %cst_5 : f32 to vector<8x256xf32>
    %8 = arith.maximumf %6, %7 : vector<8x256xf32>
    %9 = arith.truncf %8 : vector<8x256xf32> to vector<8x256xbf16>
    %c0_6 = arith.constant 0 : index
    %c0_7 = arith.constant 0 : index
    %10 = vector.load %arg4[%c0_6, %c0_7] : memref<256x256xbf16, #tpu.memory_space<vmem>>, vector<256x256xbf16>
    %cst_8 = arith.constant dense<0.000000e+00> : vector<8x256xf32>
    %11 = tpu.matmul %9, %10, %cst_8 {dimension_numbers = #tpu.dot_dimension_numbers<[1], [0], [0], [1], [0, 0, 1, 1], [], []>} : vector<8x256xbf16>, vector<256x256xbf16>, vector<8x256xf32> -> vector<8x256xf32>
    %c0_9 = arith.constant 0 : index
    %c0_10 = arith.constant 0 : index
    %12 = vector.load %arg5[%c0_9, %c0_10] : memref<1x256xf32, #tpu.memory_space<vmem>>, vector<1x256xf32>
    %13 = vector.broadcast %12 : vector<1x256xf32> to vector<8x256xf32>
    %14 = arith.addf %11, %13 : vector<8x256xf32>
    %cst_11 = arith.constant 0.000000e+00 : f32
    %15 = vector.broadcast %cst_11 : f32 to vector<8x256xf32>
    %16 = arith.maximumf %14, %15 : vector<8x256xf32>
    %17 = arith.truncf %16 : vector<8x256xf32> to vector<8x256xbf16>
    %c0_12 = arith.constant 0 : index
    %c0_13 = arith.constant 0 : index
    %18 = vector.load %arg6[%c0_12, %c0_13] : memref<256x32xbf16, #tpu.memory_space<vmem>>, vector<256x32xbf16>
    %cst_14 = arith.constant dense<0.000000e+00> : vector<8x32xf32>
    %19 = tpu.matmul %17, %18, %cst_14 {dimension_numbers = #tpu.dot_dimension_numbers<[1], [0], [0], [1], [0, 0, 1, 1], [], []>} : vector<8x256xbf16>, vector<256x32xbf16>, vector<8x32xf32> -> vector<8x32xf32>
    %c0_15 = arith.constant 0 : index
    %c0_16 = arith.constant 0 : index
    %20 = vector.load %arg7[%c0_15, %c0_16] : memref<1x32xf32, #tpu.memory_space<vmem>>, vector<1x32xf32>
    %21 = vector.broadcast %20 : vector<1x32xf32> to vector<8x32xf32>
    %22 = arith.addf %19, %21 : vector<8x32xf32>
    %c0_17 = arith.constant 0 : index
    %c0_18 = arith.constant 0 : index
    %23 = vector.load %arg8[%c0_17, %c0_18] : memref<8x32xf32, #tpu.memory_space<vmem>>, vector<8x32xf32>
    tpu.vector_store %arg8[%c0_17, %c0_18], %22 {strides = array<i32>} : memref<8x32xf32, #tpu.memory_space<vmem>>, vector<8x32xf32>,
    return
  }
  func.func @transform_0(%arg0: i32) -> (i32, i32) {
    %c0_i32 = arith.constant 0 : i32
    %c0_i32_0 = arith.constant 0 : i32
    return %arg0, %c0_i32 : i32, i32
  }
  func.func @transform_1(%arg0: i32) -> (i32, i32) {
    %c0_i32 = arith.constant 0 : i32
    %c0_i32_0 = arith.constant 0 : i32
    %c0_i32_1 = arith.constant 0 : i32
    return %c0_i32, %c0_i32_0 : i32, i32
  }
  func.func @transform_2(%arg0: i32) -> (i32, i32) {
    %c0_i32 = arith.constant 0 : i32
    %c0_i32_0 = arith.constant 0 : i32
    %c0_i32_1 = arith.constant 0 : i32
    return %c0_i32, %c0_i32_0 : i32, i32
  }
  func.func @transform_3(%arg0: i32) -> (i32, i32) {
    %c0_i32 = arith.constant 0 : i32
    %c0_i32_0 = arith.constant 0 : i32
    %c0_i32_1 = arith.constant 0 : i32
    return %c0_i32, %c0_i32_0 : i32, i32
  }
  func.func @transform_4(%arg0: i32) -> (i32, i32) {
    %c0_i32 = arith.constant 0 : i32
    %c0_i32_0 = arith.constant 0 : i32
    %c0_i32_1 = arith.constant 0 : i32
    return %c0_i32, %c0_i32_0 : i32, i32
  }
  func.func @transform_5(%arg0: i32) -> (i32, i32) {
    %c0_i32 = arith.constant 0 : i32
    %c0_i32_0 = arith.constant 0 : i32
    %c0_i32_1 = arith.constant 0 : i32
    return %c0_i32, %c0_i32_0 : i32, i32
  }
  func.func @transform_6(%arg0: i32) -> (i32, i32) {
    %c0_i32 = arith.constant 0 : i32
    %c0_i32_0 = arith.constant 0 : i32
    %c0_i32_1 = arith.constant 0 : i32
    return %c0_i32, %c0_i32_0 : i32, i32
  }
  func.func @transform_7(%arg0: i32) -> (i32, i32) {
    %c0_i32 = arith.constant 0 : i32
    %c0_i32_0 = arith.constant 0 : i32
    return %arg0, %c0_i32 : i32, i32
  }
}

</mosaic_0001>

<llo_original>
// kernel: tpu_custom_call.1
$region0: #{tpu_custom_call.1}
  #allocation0 [shape = 'u32[]', space=smem, size = 0x4, offset = 0x4, fixed_abs, tag = 'smem constant byte address 0x4 - core index']
  #allocation1 [shape = 'u32[72,128]{1,0:T(1,128)}', space=vmem, size = 0x9000, scoped, tag = 'internal scratch']
  %s0 = inlined_call_operand.vmem [shape: f32[32,128], index: 0, kind: input, shape index: {}]
  %s1 = inlined_call_operand.vmem [shape: bf16[128,256], index: 1, kind: input, shape index: {}]
  %s2 = inlined_call_operand.hbm [shape: f32[1,256], index: 2, kind: input, shape index: {}]
  %s3 = inlined_call_operand.hbm [shape: bf16[256,256], index: 3, kind: input, shape index: {}]
  %s4 = inlined_call_operand.vmem [shape: f32[1,256], index: 4, kind: input, shape index: {}]
  %s5 = inlined_call_operand.vmem [shape: bf16[256,32], index: 5, kind: input, shape index: {}]
  %s6 = inlined_call_operand.vmem [shape: f32[1,32], index: 6, kind: input, shape index: {}]
  %s7 = inlined_call_operand.hbm [shape: f32[32,32], index: 7, kind: output, shape index: {}]
  %s8 = sld [smem:[#allocation0]]
  $region69: #{tpu_custom_call.1} parent=0
    _
  %s10 = ssub.s32 1, %s8
  %s11 = scalar_select 0, %s10, %s8
  $region1: #{tpu_custom_call.1} parent=0
    #allocation2 [shape = 'u8[1024]{0}', space=vmem, size = 0x400, scoped, tag = 'input window, operand 2, single buffered']
    #allocation3 [shape = 's32[2]{0}', space=sflag, size = 0x8, scoped, tag = 'scoped memory for tpu_custom_call.1']
    #allocation4 [shape = 's32[2]{0}', space=sflag, size = 0x8, scoped, tag = 'scoped memory for tpu_custom_call.1']
    #allocation5 [shape = 'u8[131072]{0}', space=vmem, size = 0x20000, scoped, tag = 'input window, operand 3, single buffered']
    #allocation6 [shape = 's32[1]{0}', space=sflag, size = 0x4, scoped, tag = 'scoped memory for tpu_custom_call.1']
    #allocation7 [shape = 'u8[8192]{0}', space=vmem, size = 0x2000, scoped, tag = 'output window, operand 0']
    %12 = vsyncpa [#allocation3], 0
    %13 = vsyncpa [#allocation6], 0
    %14 = vsyncpa [#allocation4], 0
    %s15 = scalar_lea.sflag [#allocation4], 1
    %16 = vsyncpa %s15, 0
    loop: start=0, step=1, limit=6
    $region2: #{tpu_custom_call.1} parent=1 // loop_pre_header
      _
    $region3: #{tpu_custom_call.1} parent=1 // loop_header
      %s18 = sphi 0, %s22
      %p19 = scmp.ge.s32.totalorder %s18, 6
      %s28 = sphi 0, %s30
      %s31 = sphi 0, %s28
      %s32 = sphi 0, %s31
      %s48 = sphi 0, %s32
      %s52 = sphi 0, %s52
      %s54 = sphi 0, %s52
      %s55 = sphi 0, %s54
      %s69 = sphi 0, %s55
      %s73 = sphi 0, %s73
      %s75 = sphi 0, %s73
      %s76 = sphi 0, %s75
      %s90 = sphi 0, %s76
      %s94 = sphi 0, %s94
      %s96 = sphi 0, %s94
      %s97 = sphi 0, %s96
      %s111 = sphi 0, %s97
      %s115 = sphi 0, %s115
      %s117 = sphi 0, %s115
      %s118 = sphi 0, %s117
      %s132 = sphi 0, %s118
      %s136 = sphi 0, %s136
      %s138 = sphi 0, %s136
      %s139 = sphi 0, %s138
      %s153 = sphi 0, %s139
      %s157 = sphi 0, %s157
      %s159 = sphi 0, %s157
      %s160 = sphi 0, %s159
      %s174 = sphi 0, %s160
      %s180 = sphi 0, %s182
      %s183 = sphi 0, %s180
      %s184 = sphi 0, %s183
      %s200 = sphi 0, %s184
    $region4: #{tpu_custom_call.1} parent=1 // loop_header_branch
      %21 = sbr.rel (%p19) target = $region8
    $region5: #{tpu_custom_call.1} parent=1 // loop_body
      %s23 = ssub.s32 %s18, 1
      %s24 = ssub.s32 %s18, 2
      %s25 = sadd.s32 %s18, 1
      %s26 = ssub.s32 %s18, %s25
      %p27 = scmp.eq.s32.totalorder %s26, 0
      %s29 = sadd.s32 %s28, 1
      %s30 = scalar_select %p27, %s28, %s29
      %p33 = pneg %p27
      %p34 = scmp.eq.s32.totalorder %s18, 3
      %p35 = por %p33, %p34
      %p36 = scmp.ne.s32.totalorder %s28, %s31
      %p37 = scmp.eq.s32.totalorder %s18, 0
      %p38 = por %p36, %p37
      %p39 = scmp.ne.s32.totalorder %s28, %s31
      %p40 = scmp.eq.s32.totalorder %s23, 3
      %p41 = por %p39, %p40
      %p42 = scmp.ne.s32.totalorder %s31, %s32
      %p43 = scmp.eq.s32.totalorder %s23, 0
      %p44 = por %p42, %p43
      %p45 = scmp.ne.s32.totalorder %s31, %s32
      %p46 = scmp.eq.s32.totalorder %s24, 3
      %p47 = por %p45, %p46
      %p49 = scmp.ne.s32.totalorder %s32, %s48
      %p50 = scmp.eq.s32.totalorder %s24, 0
      %p51 = por %p49, %p50
      %s53 = sadd.s32 %s52, 1
      %p56 = scmp.eq.s32.totalorder %s18, 3
      %p57 = scmp.ne.s32.totalorder %s52, %s54
      %p58 = scmp.eq.s32.totalorder %s18, 0
      %p59 = por %p57, %p58
      %p60 = scmp.ne.s32.totalorder %s52, %s54
      %p61 = scmp.eq.s32.totalorder %s23, 3
      %p62 = por %p60, %p61
      %p63 = scmp.ne.s32.totalorder %s54, %s55
      %p64 = scmp.eq.s32.totalorder %s23, 0
      %p65 = por %p63, %p64
      %p66 = scmp.ne.s32.totalorder %s54, %s55
      %p67 = scmp.eq.s32.totalorder %s24, 3
      %p68 = por %p66, %p67
      %p70 = scmp.ne.s32.totalorder %s55, %s69
      %p71 = scmp.eq.s32.totalorder %s24, 0
      %p72 = por %p70, %p71
      %s74 = sadd.s32 %s73, 1
      %p77 = scmp.eq.s32.totalorder %s18, 3
      %p78 = scmp.ne.s32.totalorder %s73, %s75
      %p79 = scmp.eq.s32.totalorder %s18, 0
      %p80 = por %p78, %p79
      %p81 = scmp.ne.s32.totalorder %s73, %s75
      %p82 = scmp.eq.s32.totalorder %s23, 3
      %p83 = por %p81, %p82
      %p84 = scmp.ne.s32.totalorder %s75, %s76
      %p85 = scmp.eq.s32.totalorder %s23, 0
      %p86 = por %p84, %p85
      %p87 = scmp.ne.s32.totalorder %s75, %s76
      %p88 = scmp.eq.s32.totalorder %s24, 3
      %p89 = por %p87, %p88
      %p91 = scmp.ne.s32.totalorder %s76, %s90
      %p92 = scmp.eq.s32.totalorder %s24, 0
      %p93 = por %p91, %p92
      %s95 = sadd.s32 %s94, 1
      %p98 = scmp.eq.s32.totalorder %s18, 3
      %p99 = scmp.ne.s32.totalorder %s94, %s96
      %p100 = scmp.eq.s32.totalorder %s18, 0
      %p101 = por %p99, %p100
      %p102 = scmp.ne.s32.totalorder %s94, %s96
      %p103 = scmp.eq.s32.totalorder %s23, 3
      %p104 = por %p102, %p103
      %p105 = scmp.ne.s32.totalorder %s96, %s97
      %p106 = scmp.eq.s32.totalorder %s23, 0
      %p107 = por %p105, %p106
      %p108 = scmp.ne.s32.totalorder %s96, %s97
      %p109 = scmp.eq.s32.totalorder %s24, 3
      %p110 = por %p108, %p109
      %p112 = scmp.ne.s32.totalorder %s97, %s111
      %p113 = scmp.eq.s32.totalorder %s24, 0
      %p114 = por %p112, %p113
      %s116 = sadd.s32 %s115, 1
      %p119 = scmp.eq.s32.totalorder %s18, 3
      %p120 = scmp.ne.s32.totalorder %s115, %s117
      %p121 = scmp.eq.s32.totalorder %s18, 0
      %p122 = por %p120, %p121
      %p123 = scmp.ne.s32.totalorder %s115, %s117
      %p124 = scmp.eq.s32.totalorder %s23, 3
      %p125 = por %p123, %p124
      %p126 = scmp.ne.s32.totalorder %s117, %s118
      %p127 = scmp.eq.s32.totalorder %s23, 0
      %p128 = por %p126, %p127
      %p129 = scmp.ne.s32.totalorder %s117, %s118
      %p130 = scmp.eq.s32.totalorder %s24, 3
      %p131 = por %p129, %p130
      %p133 = scmp.ne.s32.totalorder %s118, %s132
      %p134 = scmp.eq.s32.totalorder %s24, 0
      %p135 = por %p133, %p134
      %s137 = sadd.s32 %s136, 1
      %p140 = scmp.eq.s32.totalorder %s18, 3
      %p141 = scmp.ne.s32.totalorder %s136, %s138
      %p142 = scmp.eq.s32.totalorder %s18, 0
      %p143 = por %p141, %p142
      %p144 = scmp.ne.s32.totalorder %s136, %s138
      %p145 = scmp.eq.s32.totalorder %s23, 3
      %p146 = por %p144, %p145
      %p147 = scmp.ne.s32.totalorder %s138, %s139
      %p148 = scmp.eq.s32.totalorder %s23, 0
      %p149 = por %p147, %p148
      %p150 = scmp.ne.s32.totalorder %s138, %s139
      %p151 = scmp.eq.s32.totalorder %s24, 3
      %p152 = por %p150, %p151
      %p154 = scmp.ne.s32.totalorder %s139, %s153
      %p155 = scmp.eq.s32.totalorder %s24, 0
      %p156 = por %p154, %p155
      %s158 = sadd.s32 %s157, 1
      %p161 = scmp.eq.s32.totalorder %s18, 3
      %p162 = scmp.ne.s32.totalorder %s157, %s159
      %p163 = scmp.eq.s32.totalorder %s18, 0
      %p164 = por %p162, %p163
      %p165 = scmp.ne.s32.totalorder %s157, %s159
      %p166 = scmp.eq.s32.totalorder %s23, 3
      %p167 = por %p165, %p166
      %p168 = scmp.ne.s32.totalorder %s159, %s160
      %p169 = scmp.eq.s32.totalorder %s23, 0
      %p170 = por %p168, %p169
      %p171 = scmp.ne.s32.totalorder %s159, %s160
      %p172 = scmp.eq.s32.totalorder %s24, 3
      %p173 = por %p171, %p172
      %p175 = scmp.ne.s32.totalorder %s160, %s174
      %p176 = scmp.eq.s32.totalorder %s24, 0
      %p177 = por %p175, %p176
      %s178 = ssub.s32 %s18, %s25
      %p179 = scmp.eq.s32.totalorder %s178, 0
      %s181 = sadd.s32 %s180, 1
      %s182 = scalar_select %p179, %s180, %s181
      %p185 = pneg %p179
      %p186 = scmp.eq.s32.totalorder %s18, 3
      %p187 = por %p185, %p186
      %p188 = scmp.ne.s32.totalorder %s180, %s183
      %p189 = scmp.eq.s32.totalorder %s18, 0
      %p190 = por %p188, %p189
      %p191 = scmp.ne.s32.totalorder %s180, %s183
      %p192 = scmp.eq.s32.totalorder %s23, 3
      %p193 = por %p191, %p192
      %p194 = scmp.ne.s32.totalorder %s183, %s184
      %p195 = scmp.eq.s32.totalorder %s23, 0
      %p196 = por %p194, %p195
      %p197 = scmp.ne.s32.totalorder %s183, %s184
      %p198 = scmp.eq.s32.totalorder %s24, 3
      %p199 = por %p197, %p198
      %p201 = scmp.ne.s32.totalorder %s184, %s200
      %p202 = scmp.eq.s32.totalorder %s24, 0
      %p203 = por %p201, %p202
      %p204 = scmp.le.s32.totalorder 1, %s18
      %p205 = scmp.lt.s32.totalorder %s18, 5
      %p206 = pnand %p204, %p205
      %p207 = pneg %p206
      // Predicated region
      $region9: #{tpu_custom_call.1} parent=5 // pred_check
        _
      $region10: #{tpu_custom_call.1} parent=5 // pred_check_branch
        %209 = sbr.rel (%p206) target = $region12
      $region11: #{tpu_custom_call.1} parent=5 // pred_region
        %s210 = ssub.s32 %s18, 1
        // Predicated region
        $region13: #{tpu_custom_call.1} parent=11 // pred_check
          %p211 = pneg %p65
        $region14: #{tpu_custom_call.1} parent=11 // pred_check_branch
          %213 = sbr.rel (%p211) target = $region16
        $region15: #{tpu_custom_call.1} parent=11 // pred_region
          _
        $region16: #{tpu_custom_call.1} parent=11 // pred_fallthru
          _
        // Predicated region
        $region17: #{tpu_custom_call.1} parent=11 // pred_check
          %p214 = pneg %p86
        $region18: #{tpu_custom_call.1} parent=11 // pred_check_branch
          %216 = sbr.rel (%p214) target = $region20
        $region19: #{tpu_custom_call.1} parent=11 // pred_region
          %218 = vsyncadd [#allocation3], 0
          %s220 = sshll.u32 %s2, 4
          %s221 = int_to_ptr.hbm [resolvable:$true] %s220
          %s222 = sshll.u32 [#allocation2], 4
          %s223 = int_to_ptr.vmem [resolvable:$true] %s222
          %225 = dma.hbm_to_vmem [thread:$0]  %s221, 32, %s223, [#allocation3]
        $region20: #{tpu_custom_call.1} parent=11 // pred_fallthru
          _
        // Predicated region
        $region21: #{tpu_custom_call.1} parent=11 // pred_check
          %p226 = pneg %p107
        $region22: #{tpu_custom_call.1} parent=11 // pred_check_branch
          %228 = sbr.rel (%p226) target = $region24
        $region23: #{tpu_custom_call.1} parent=11 // pred_region
          %230 = vsyncadd [#allocation6], 0
          %s231 = sshll.u32 %s3, 4
          %s232 = int_to_ptr.hbm [resolvable:$true] %s231
          %s233 = sshll.u32 [#allocation5], 4
          %s234 = int_to_ptr.vmem [resolvable:$true] %s233
          %239 = dma.hbm_to_vmem [thread:$0]  %s232, 4096, %s234, [#allocation6], 128, 128, 8
        $region24: #{tpu_custom_call.1} parent=11 // pred_fallthru
          _
        // Predicated region
        $region25: #{tpu_custom_call.1} parent=11 // pred_check
          %p240 = pneg %p128
        $region26: #{tpu_custom_call.1} parent=11 // pred_check_branch
          %242 = sbr.rel (%p240) target = $region28
        $region27: #{tpu_custom_call.1} parent=11 // pred_region
          _
        $region28: #{tpu_custom_call.1} parent=11 // pred_fallthru
          _
        // Predicated region
        $region29: #{tpu_custom_call.1} parent=11 // pred_check
          %p243 = pneg %p149
        $region30: #{tpu_custom_call.1} parent=11 // pred_check_branch
          %245 = sbr.rel (%p243) target = $region32
        $region31: #{tpu_custom_call.1} parent=11 // pred_region
          _
        $region32: #{tpu_custom_call.1} parent=11 // pred_fallthru
          _
        // Predicated region
        $region33: #{tpu_custom_call.1} parent=11 // pred_check
          %p246 = pneg %p170
        $region34: #{tpu_custom_call.1} parent=11 // pred_check_branch
          %248 = sbr.rel (%p246) target = $region36
        $region35: #{tpu_custom_call.1} parent=11 // pred_region
          _
        $region36: #{tpu_custom_call.1} parent=11 // pred_fallthru
          _
      $region12: #{tpu_custom_call.1} parent=5 // pred_fallthru
        _
      %p249 = scmp.lt.s32.totalorder %s18, 4
      // Predicated region
      $region37: #{tpu_custom_call.1} parent=5 // pred_check
        %p250 = pneg %p249
      $region38: #{tpu_custom_call.1} parent=5 // pred_check_branch
        %252 = sbr.rel (%p250) target = $region40
      $region39: #{tpu_custom_call.1} parent=5 // pred_region
        // Predicated region
        $region41: #{tpu_custom_call.1} parent=39 // pred_check
          %p253 = pneg %p38
        $region42: #{tpu_custom_call.1} parent=39 // pred_check_branch
          %255 = sbr.rel (%p253) target = $region44
        $region43: #{tpu_custom_call.1} parent=39 // pred_region
          %p256 = scmp.lt.s32.totalorder %s18, 3
          %s257 = scalar_select %p256, %s18, 3
          %s258 = smul.addr %s257, 8
          %s259 = scalar_lea.vmem %s0, %s258
        $region44: #{tpu_custom_call.1} parent=39 // pred_fallthru
          _
      $region40: #{tpu_custom_call.1} parent=5 // pred_fallthru
        _
      %p260 = scmp.le.s32.totalorder 1, %s18
      %p261 = scmp.lt.s32.totalorder %s18, 5
      %p262 = pnand %p260, %p261
      %p263 = pneg %p262
      // Predicated region
      $region45: #{tpu_custom_call.1} parent=5 // pred_check
        _
      $region46: #{tpu_custom_call.1} parent=5 // pred_check_branch
        %265 = sbr.rel (%p262) target = $region48
      $region47: #{tpu_custom_call.1} parent=5 // pred_region
        %s266 = ssub.s32 %s18, 1
        // Predicated region
        $region49: #{tpu_custom_call.1} parent=47 // pred_check
          %p267 = pneg %p86
        $region50: #{tpu_custom_call.1} parent=47 // pred_check_branch
          %269 = sbr.rel (%p267) target = $region52
        $region51: #{tpu_custom_call.1} parent=47 // pred_region
          %271 = dma.done [#allocation3], 32
        $region52: #{tpu_custom_call.1} parent=47 // pred_fallthru
          _
        // Predicated region
        $region53: #{tpu_custom_call.1} parent=47 // pred_check
          %p272 = pneg %p107
        $region54: #{tpu_custom_call.1} parent=47 // pred_check_branch
          %274 = sbr.rel (%p272) target = $region56
        $region55: #{tpu_custom_call.1} parent=47 // pred_region
          %276 = dma.done [#allocation6], 4096
        $region56: #{tpu_custom_call.1} parent=47 // pred_fallthru
          _
        %p277 = scmp.lt.s32.totalorder %s23, 3
        %s278 = scalar_select %p277, %s23, 3
        %s279 = smul.addr %s278, 8
        %s280 = scalar_lea.vmem %s0, %s279
        %p281 = pneg %p44
        %p282 = pneg %p41
        %p283 = pneg %p65
        %p284 = pneg %p62
        %p285 = pneg %p86
        %p286 = pneg %p83
        %p287 = pneg %p107
        %p288 = pneg %p104
        %p289 = pneg %p128
        %p290 = pneg %p125
        %p291 = pneg %p149
        %p292 = pneg %p146
        %p293 = pneg %p170
        %p294 = pneg %p167
        %p295 = pneg %p196
        %p296 = pneg %p193
        %s297 = sand.u32 %s183, 1
        %s298 = scalar_lea.sflag [#allocation4], %s297
        %s299 = sand.u32 %s183, 1
        %s300 = smul.addr %s299, 8
        %s301 = scalar_lea.vmem [#allocation7], %s300
        %p302 = scmp.lt.s32.totalorder %s23, 3
        %s303 = scalar_select %p302, %s23, 3
        %s304 = smul.addr %s303, 8
        %s305 = scalar_lea.vmem %s0, %s304
        %v306 = vld [vmem:[%s305] sm:$0xff]
        %v307 = vpack.c.bf16 %v306, %v306
        %v308 = vld [vmem:[%s1] sm:$0xff]
        %v309 = vld [vmem:[%s1 + $0x8] sm:$0xff]
        %v310 = vld [vmem:[%s1 + $0x10] sm:$0xff]
        %v311 = vld [vmem:[%s1 + $0x18] sm:$0xff]
        %v312 = vld [vmem:[%s1 + $0x20] sm:$0xff]
        %v313 = vld [vmem:[%s1 + $0x28] sm:$0xff]
        %v314 = vld [vmem:[%s1 + $0x30] sm:$0xff]
        %v315 = vld [vmem:[%s1 + $0x38] sm:$0xff]
        %v316 = vld [vmem:[%s1 + $0x40] sm:$0xff]
        %v317 = vld [vmem:[%s1 + $0x48] sm:$0xff]
        %v318 = vld [vmem:[%s1 + $0x50] sm:$0xff]
        %v319 = vld [vmem:[%s1 + $0x58] sm:$0xff]
        %v320 = vld [vmem:[%s1 + $0x60] sm:$0xff]
        %v321 = vld [vmem:[%s1 + $0x68] sm:$0xff]
        %v322 = vld [vmem:[%s1 + $0x70] sm:$0xff]
        %v323 = vld [vmem:[%s1 + $0x78] sm:$0xff]
        %v324 = vld [vmem:[#allocation2] sm:$0x3]
        %v326 = vperm.slane %v324, 0
        %v327 = vperm.slane %v324, 1
        %v346 = vunpack.c.l.b16 %v308
        %v347 = vunpack.c.h.b16 %v308
        %v348 = vunpack.c.l.b16 %v309
        %v349 = vunpack.c.h.b16 %v309
        %v350 = vunpack.c.l.b16 %v310
        %v351 = vunpack.c.h.b16 %v310
        %v352 = vunpack.c.l.b16 %v311
        %v353 = vunpack.c.h.b16 %v311
        %v354 = vunpack.c.l.b16 %v312
        %v355 = vunpack.c.h.b16 %v312
        %v356 = vunpack.c.l.b16 %v313
        %v357 = vunpack.c.h.b16 %v313
        %v358 = vunpack.c.l.b16 %v314
        %v359 = vunpack.c.h.b16 %v314
        %v360 = vunpack.c.l.b16 %v315
        %v361 = vunpack.c.h.b16 %v315
        %v362 = vunpack.c.l.b16 %v316
        %v363 = vunpack.c.h.b16 %v316
        %v364 = vunpack.c.l.b16 %v317
        %v365 = vunpack.c.h.b16 %v317
        %v366 = vunpack.c.l.b16 %v318
        %v367 = vunpack.c.h.b16 %v318
        %v368 = vunpack.c.l.b16 %v319
        %v369 = vunpack.c.h.b16 %v319
        %v370 = vunpack.c.l.b16 %v320
        %v371 = vunpack.c.h.b16 %v320
        %v372 = vunpack.c.l.b16 %v321
        %v373 = vunpack.c.h.b16 %v321
        %v374 = vunpack.c.l.b16 %v322
        %v375 = vunpack.c.h.b16 %v322
        %v376 = vunpack.c.l.b16 %v323
        %v377 = vunpack.c.h.b16 %v323
        %v378 = vpack.c.b16 %v348, %v346
        %v379 = vpack.c.b16 %v349, %v347
        %v380 = vpack.c.b16 %v352, %v350
        %v381 = vpack.c.b16 %v353, %v351
        %v382 = vpack.c.b16 %v356, %v354
        %v383 = vpack.c.b16 %v357, %v355
        %v384 = vpack.c.b16 %v360, %v358
        %v385 = vpack.c.b16 %v361, %v359
        %v386 = vpack.c.b16 %v364, %v362
        %v387 = vpack.c.b16 %v365, %v363
        %v388 = vpack.c.b16 %v368, %v366
        %v389 = vpack.c.b16 %v369, %v367
        %v390 = vpack.c.b16 %v372, %v370
        %v391 = vpack.c.b16 %v373, %v371
        %v392 = vpack.c.b16 %v376, %v374
        %v393 = vpack.c.b16 %v377, %v375
        %410 = vmatpush.bf16.msra.mxu0 %v392
        %411 = vmatpush.bf16.msra.mxu0 %v390
        %412 = vmatpush.bf16.msra.mxu0 %v388
        %413 = vmatpush.bf16.msra.mxu0 %v386
        %414 = vmatpush.bf16.msra.mxu0 %v384
        %415 = vmatpush.bf16.msra.mxu0 %v382
        %416 = vmatpush.bf16.msra.mxu0 %v380
        %417 = vmatpush.bf16.msra.mxu0 %v378
        %418 = vmatmul.bf16.gmra.mxu0 %v307
        %v419 = vpop.f32.mrf.mxu0
        %v420 = vadd.f32 %v326, %v419
        %v421 = vpop.f32.mrf.mxu0
        %422 = vdwg.mxu0
        %423 = vmatpush.bf16.msra.mxu0 %v393
        %424 = vmatpush.bf16.msra.mxu0 %v391
        %425 = vmatpush.bf16.msra.mxu0 %v389
        %426 = vmatpush.bf16.msra.mxu0 %v387
        %427 = vmatpush.bf16.msra.mxu0 %v385
        %428 = vmatpush.bf16.msra.mxu0 %v383
        %429 = vmatpush.bf16.msra.mxu0 %v381
        %430 = vmatpush.bf16.msra.mxu0 %v379
        %431 = vmatmul.bf16.gmra.mxu0 %v307
        %v432 = vpop.f32.mrf.mxu0
        %v433 = vadd.f32 %v327, %v432
        %v434 = vpop.f32.mrf.mxu0
        %435 = vdwg.mxu0
        %v436 = vmax.f32 %v420, 0.0
        %v437 = vmax.f32 %v433, 0.0
        %v438 = vpack.c.bf16 %v436, %v436
        %v439 = vpack.c.bf16 %v437, %v437
        %v440 = vld [vmem:[#allocation5] sm:$0xff]
        %v441 = vld [vmem:[#allocation5 + $0x8] sm:$0xff]
        %v442 = vld [vmem:[#allocation5 + $0x10] sm:$0xff]
        %v443 = vld [vmem:[#allocation5 + $0x18] sm:$0xff]
        %v444 = vld [vmem:[#allocation5 + $0x20] sm:$0xff]
        %v445 = vld [vmem:[#allocation5 + $0x28] sm:$0xff]
        %v446 = vld [vmem:[#allocation5 + $0x30] sm:$0xff]
        %v447 = vld [vmem:[#allocation5 + $0x38] sm:$0xff]
        %v448 = vld [vmem:[#allocation5 + $0x40] sm:$0xff]
        %v449 = vld [vmem:[#allocation5 + $0x48] sm:$0xff]
        %v450 = vld [vmem:[#allocation5 + $0x50] sm:$0xff]
        %v451 = vld [vmem:[#allocation5 + $0x58] sm:$0xff]
        %v452 = vld [vmem:[#allocation5 + $0x60] sm:$0xff]
        %v453 = vld [vmem:[#allocation5 + $0x68] sm:$0xff]
        %v454 = vld [vmem:[#allocation5 + $0x70] sm:$0xff]
        %v455 = vld [vmem:[#allocation5 + $0x78] sm:$0xff]
        %v456 = vld [vmem:[#allocation5 + $0x80] sm:$0xff]
        %v457 = vld [vmem:[#allocation5 + $0x88] sm:$0xff]
        %v458 = vld [vmem:[#allocation5 + $0x90] sm:$0xff]
        %v459 = vld [vmem:[#allocation5 + $0x98] sm:$0xff]
        %v460 = vld [vmem:[#allocation5 + $0xa0] sm:$0xff]
        %v461 = vld [vmem:[#allocation5 + $0xa8] sm:$0xff]
        %v462 = vld [vmem:[#allocation5 + $0xb0] sm:$0xff]
        %v463 = vld [vmem:[#allocation5 + $0xb8] sm:$0xff]
        %v464 = vld [vmem:[#allocation5 + $0xc0] sm:$0xff]
        %v465 = vld [vmem:[#allocation5 + $0xc8] sm:$0xff]
        %v466 = vld [vmem:[#allocation5 + $0xd0] sm:$0xff]
        %v467 = vld [vmem:[#allocation5 + $0xd8] sm:$0xff]
        %v468 = vld [vmem:[#allocation5 + $0xe0] sm:$0xff]
        %v469 = vld [vmem:[#allocation5 + $0xe8] sm:$0xff]
        %v470 = vld [vmem:[#allocation5 + $0xf0] sm:$0xff]
        %v471 = vld [vmem:[#allocation5 + $0xf8] sm:$0xff]
        %v472 = vld [vmem:[%s4] sm:$0x3]
        %v474 = vperm.slane %v472, 0
        %v475 = vperm.slane %v472, 1
        %v510 = vunpack.c.l.b16 %v440
        %v511 = vunpack.c.h.b16 %v440
        %v512 = vunpack.c.l.b16 %v441
        %v513 = vunpack.c.h.b16 %v441
        %v514 = vunpack.c.l.b16 %v442
        %v515 = vunpack.c.h.b16 %v442
        %v516 = vunpack.c.l.b16 %v443
        %v517 = vunpack.c.h.b16 %v443
        %v518 = vunpack.c.l.b16 %v444
        %v519 = vunpack.c.h.b16 %v444
        %v520 = vunpack.c.l.b16 %v445
        %v521 = vunpack.c.h.b16 %v445
        %v522 = vunpack.c.l.b16 %v446
        %v523 = vunpack.c.h.b16 %v446
        %v524 = vunpack.c.l.b16 %v447
        %v525 = vunpack.c.h.b16 %v447
        %v526 = vunpack.c.l.b16 %v448
        %v527 = vunpack.c.h.b16 %v448
        %v528 = vunpack.c.l.b16 %v449
        %v529 = vunpack.c.h.b16 %v449
        %v530 = vunpack.c.l.b16 %v450
        %v531 = vunpack.c.h.b16 %v450
        %v532 = vunpack.c.l.b16 %v451
        %v533 = vunpack.c.h.b16 %v451
        %v534 = vunpack.c.l.b16 %v452
        %v535 = vunpack.c.h.b16 %v452
        %v536 = vunpack.c.l.b16 %v453
        %v537 = vunpack.c.h.b16 %v453
        %v538 = vunpack.c.l.b16 %v454
        %v539 = vunpack.c.h.b16 %v454
        %v540 = vunpack.c.l.b16 %v455
        %v541 = vunpack.c.h.b16 %v455
        %v542 = vunpack.c.l.b16 %v456
        %v543 = vunpack.c.h.b16 %v456
        %v544 = vunpack.c.l.b16 %v457
        %v545 = vunpack.c.h.b16 %v457
        %v546 = vunpack.c.l.b16 %v458
        %v547 = vunpack.c.h.b16 %v458
        %v548 = vunpack.c.l.b16 %v459
        %v549 = vunpack.c.h.b16 %v459
        %v550 = vunpack.c.l.b16 %v460
        %v551 = vunpack.c.h.b16 %v460
        %v552 = vunpack.c.l.b16 %v461
        %v553 = vunpack.c.h.b16 %v461
        %v554 = vunpack.c.l.b16 %v462
        %v555 = vunpack.c.h.b16 %v462
        %v556 = vunpack.c.l.b16 %v463
        %v557 = vunpack.c.h.b16 %v463
        %v558 = vunpack.c.l.b16 %v464
        %v559 = vunpack.c.h.b16 %v464
        %v560 = vunpack.c.l.b16 %v465
        %v561 = vunpack.c.h.b16 %v465
        %v562 = vunpack.c.l.b16 %v466
        %v563 = vunpack.c.h.b16 %v466
        %v564 = vunpack.c.l.b16 %v467
        %v565 = vunpack.c.h.b16 %v467
        %v566 = vunpack.c.l.b16 %v468
        %v567 = vunpack.c.h.b16 %v468
        %v568 = vunpack.c.l.b16 %v469
        %v569 = vunpack.c.h.b16 %v469
        %v570 = vunpack.c.l.b16 %v470
        %v571 = vunpack.c.h.b16 %v470
        %v572 = vunpack.c.l.b16 %v471
        %v573 = vunpack.c.h.b16 %v471
        %v574 = vpack.c.b16 %v512, %v510
        %v575 = vpack.c.b16 %v513, %v511
        %v576 = vpack.c.b16 %v516, %v514
        %v577 = vpack.c.b16 %v517, %v515
        %v578 = vpack.c.b16 %v520, %v518
        %v579 = vpack.c.b16 %v521, %v519
        %v580 = vpack.c.b16 %v524, %v522
        %v581 = vpack.c.b16 %v525, %v523
        %v582 = vpack.c.b16 %v528, %v526
        %v583 = vpack.c.b16 %v529, %v527
        %v584 = vpack.c.b16 %v532, %v530
        %v585 = vpack.c.b16 %v533, %v531
        %v586 = vpack.c.b16 %v536, %v534
        %v587 = vpack.c.b16 %v537, %v535
        %v588 = vpack.c.b16 %v540, %v538
        %v589 = vpack.c.b16 %v541, %v539
        %v590 = vpack.c.b16 %v544, %v542
        %v591 = vpack.c.b16 %v545, %v543
        %v592 = vpack.c.b16 %v548, %v546
        %v593 = vpack.c.b16 %v549, %v547
        %v594 = vpack.c.b16 %v552, %v550
        %v595 = vpack.c.b16 %v553, %v551
        %v596 = vpack.c.b16 %v556, %v554
        %v597 = vpack.c.b16 %v557, %v555
        %v598 = vpack.c.b16 %v560, %v558
        %v599 = vpack.c.b16 %v561, %v559
        %v600 = vpack.c.b16 %v564, %v562
        %v601 = vpack.c.b16 %v565, %v563
        %v602 = vpack.c.b16 %v568, %v566
        %v603 = vpack.c.b16 %v569, %v567
        %v604 = vpack.c.b16 %v572, %v570
        %v605 = vpack.c.b16 %v573, %v571
        %638 = vmatpush.bf16.msra.mxu0 %v588
        %639 = vmatpush.bf16.msra.mxu0 %v586
        %640 = vmatpush.bf16.msra.mxu0 %v584
        %641 = vmatpush.bf16.msra.mxu0 %v582
        %642 = vmatpush.bf16.msra.mxu0 %v580
        %643 = vmatpush.bf16.msra.mxu0 %v578
        %644 = vmatpush.bf16.msra.mxu0 %v576
        %645 = vmatpush.bf16.msra.mxu0 %v574
        %646 = vmatmul.bf16.gmra.mxu0 %v438
        %v647 = vpop.f32.mrf.mxu0
        %v648 = vadd.f32 %v474, %v647
        %v649 = vpop.f32.mrf.mxu0
        %650 = vdwg.mxu0
        %651 = vmatpush.bf16.msra.mxu0 %v604
        %652 = vmatpush.bf16.msra.mxu0 %v602
        %653 = vmatpush.bf16.msra.mxu0 %v600
        %654 = vmatpush.bf16.msra.mxu0 %v598
        %655 = vmatpush.bf16.msra.mxu0 %v596
        %656 = vmatpush.bf16.msra.mxu0 %v594
        %657 = vmatpush.bf16.msra.mxu0 %v592
        %658 = vmatpush.bf16.msra.mxu0 %v590
        %659 = vmatmul.bf16.gmra.mxu0 %v439
        %v660 = vpop.f32.mrf.mxu0
        %v661 = vadd.f32 %v648, %v660
        %v662 = vpop.f32.mrf.mxu0
        %663 = vdwg.mxu0
        %664 = vmatpush.bf16.msra.mxu0 %v589
        %665 = vmatpush.bf16.msra.mxu0 %v587
        %666 = vmatpush.bf16.msra.mxu0 %v585
        %667 = vmatpush.bf16.msra.mxu0 %v583
        %668 = vmatpush.bf16.msra.mxu0 %v581
        %669 = vmatpush.bf16.msra.mxu0 %v579
        %670 = vmatpush.bf16.msra.mxu0 %v577
        %671 = vmatpush.bf16.msra.mxu0 %v575
        %672 = vmatmul.bf16.gmra.mxu0 %v438
        %v673 = vpop.f32.mrf.mxu0
        %v674 = vadd.f32 %v475, %v673
        %v675 = vpop.f32.mrf.mxu0
        %676 = vdwg.mxu0
        %677 = vmatpush.bf16.msra.mxu0 %v605
        %678 = vmatpush.bf16.msra.mxu0 %v603
        %679 = vmatpush.bf16.msra.mxu0 %v601
        %680 = vmatpush.bf16.msra.mxu0 %v599
        %681 = vmatpush.bf16.msra.mxu0 %v597
        %682 = vmatpush.bf16.msra.mxu0 %v595
        %683 = vmatpush.bf16.msra.mxu0 %v593
        %684 = vmatpush.bf16.msra.mxu0 %v591
        %685 = vmatmul.bf16.gmra.mxu0 %v439
        %v686 = vpop.f32.mrf.mxu0
        %v687 = vadd.f32 %v674, %v686
        %v688 = vpop.f32.mrf.mxu0
        %689 = vdwg.mxu0
        %v690 = vmax.f32 %v661, 0.0
        %v691 = vmax.f32 %v687, 0.0
        %v692 = vpack.c.bf16 %v690, %v690
        %v693 = vpack.c.bf16 %v691, %v691
        %v694 = vld [vmem:[%s5] sm:$0xf]
        %v695 = vld [vmem:[%s5 + $0x4] sm:$0xf]
        %v696 = vld [vmem:[%s5 + $0x8] sm:$0xf]
        %v697 = vld [vmem:[%s5 + $0xc] sm:$0xf]
        %v698 = vld [vmem:[%s5 + $0x10] sm:$0xf]
        %v699 = vld [vmem:[%s5 + $0x14] sm:$0xf]
        %v700 = vld [vmem:[%s5 + $0x18] sm:$0xf]
        %v701 = vld [vmem:[%s5 + $0x1c] sm:$0xf]
        %v702 = vld [vmem:[%s5 + $0x20] sm:$0xf]
        %v703 = vld [vmem:[%s5 + $0x24] sm:$0xf]
        %v704 = vld [vmem:[%s5 + $0x28] sm:$0xf]
        %v705 = vld [vmem:[%s5 + $0x2c] sm:$0xf]
        %v706 = vld [vmem:[%s5 + $0x30] sm:$0xf]
        %v707 = vld [vmem:[%s5 + $0x34] sm:$0xf]
        %v708 = vld [vmem:[%s5 + $0x38] sm:$0xf]
        %v709 = vld [vmem:[%s5 + $0x3c] sm:$0xf]
        %v710 = vld [vmem:[%s5 + $0x40] sm:$0xf]
        %v711 = vld [vmem:[%s5 + $0x44] sm:$0xf]
        %v712 = vld [vmem:[%s5 + $0x48] sm:$0xf]
        %v713 = vld [vmem:[%s5 + $0x4c] sm:$0xf]
        %v714 = vld [vmem:[%s5 + $0x50] sm:$0xf]
        %v715 = vld [vmem:[%s5 + $0x54] sm:$0xf]
        %v716 = vld [vmem:[%s5 + $0x58] sm:$0xf]
        %v717 = vld [vmem:[%s5 + $0x5c] sm:$0xf]
        %v718 = vld [vmem:[%s5 + $0x60] sm:$0xf]
        %v719 = vld [vmem:[%s5 + $0x64] sm:$0xf]
        %v720 = vld [vmem:[%s5 + $0x68] sm:$0xf]
        %v721 = vld [vmem:[%s5 + $0x6c] sm:$0xf]
        %v722 = vld [vmem:[%s5 + $0x70] sm:$0xf]
        %v723 = vld [vmem:[%s5 + $0x74] sm:$0xf]
        %v724 = vld [vmem:[%s5 + $0x78] sm:$0xf]
        %v725 = vld [vmem:[%s5 + $0x7c] sm:$0xf]
        %v726 = vld [vmem:[%s6] sm:$0x1]
        %v728 = vperm.slane %v726, 0
        %v762 = vunpack.c.l.b16 %v694
        %v763 = vunpack.c.l.b16 %v695
        %v764 = vunpack.c.l.b16 %v696
        %v765 = vunpack.c.l.b16 %v697
        %v766 = vunpack.c.l.b16 %v698
        %v767 = vunpack.c.l.b16 %v699
        %v768 = vunpack.c.l.b16 %v700
        %v769 = vunpack.c.l.b16 %v701
        %v770 = vunpack.c.l.b16 %v702
        %v771 = vunpack.c.l.b16 %v703
        %v772 = vunpack.c.l.b16 %v704
        %v773 = vunpack.c.l.b16 %v705
        %v774 = vunpack.c.l.b16 %v706
        %v775 = vunpack.c.l.b16 %v707
        %v776 = vunpack.c.l.b16 %v708
        %v777 = vunpack.c.l.b16 %v709
        %v778 = vunpack.c.l.b16 %v710
        %v779 = vunpack.c.l.b16 %v711
        %v780 = vunpack.c.l.b16 %v712
        %v781 = vunpack.c.l.b16 %v713
        %v782 = vunpack.c.l.b16 %v714
        %v783 = vunpack.c.l.b16 %v715
        %v784 = vunpack.c.l.b16 %v716
        %v785 = vunpack.c.l.b16 %v717
        %v786 = vunpack.c.l.b16 %v718
        %v787 = vunpack.c.l.b16 %v719
        %v788 = vunpack.c.l.b16 %v720
        %v789 = vunpack.c.l.b16 %v721
        %v790 = vunpack.c.l.b16 %v722
        %v791 = vunpack.c.l.b16 %v723
        %v792 = vunpack.c.l.b16 %v724
        %v793 = vunpack.c.l.b16 %v725
        %v794 = vpack.c.b16 %v763, %v762
        %v795 = vpack.c.b16 %v765, %v764
        %v796 = vpack.c.b16 %v767, %v766
        %v797 = vpack.c.b16 %v769, %v768
        %v798 = vpack.c.b16 %v771, %v770
        %v799 = vpack.c.b16 %v773, %v772
        %v800 = vpack.c.b16 %v775, %v774
        %v801 = vpack.c.b16 %v777, %v776
        %v802 = vpack.c.b16 %v779, %v778
        %v803 = vpack.c.b16 %v781, %v780
        %v804 = vpack.c.b16 %v783, %v782
        %v805 = vpack.c.b16 %v785, %v784
        %v806 = vpack.c.b16 %v787, %v786
        %v807 = vpack.c.b16 %v789, %v788
        %v808 = vpack.c.b16 %v791, %v790
        %v809 = vpack.c.b16 %v793, %v792
        %826 = vmatpush.bf16.msra.mxu0 %v801
        %827 = vmatpush.bf16.msra.mxu0 %v800
        %828 = vmatpush.bf16.msra.mxu0 %v799
        %829 = vmatpush.bf16.msra.mxu0 %v798
        %830 = vmatpush.bf16.msra.mxu0 %v797
        %831 = vmatpush.bf16.msra.mxu0 %v796
        %832 = vmatpush.bf16.msra.mxu0 %v795
        %833 = vmatpush.bf16.msra.mxu0 %v794
        %834 = vmatmul.bf16.gmra.mxu0 %v692
        %v835 = vpop.f32.mrf.mxu0
        %v836 = vadd.f32 %v728, %v835
        %v837 = vpop.f32.mrf.mxu0
        %838 = vdwg.mxu0
        %839 = vmatpush.bf16.msra.mxu0 %v809
        %840 = vmatpush.bf16.msra.mxu0 %v808
        %841 = vmatpush.bf16.msra.mxu0 %v807
        %842 = vmatpush.bf16.msra.mxu0 %v806
        %843 = vmatpush.bf16.msra.mxu0 %v805
        %844 = vmatpush.bf16.msra.mxu0 %v804
        %845 = vmatpush.bf16.msra.mxu0 %v803
        %846 = vmatpush.bf16.msra.mxu0 %v802
        %847 = vmatmul.bf16.gmra.mxu0 %v693
        %v848 = vpop.f32.mrf.mxu0
        %v849 = vadd.f32 %v836, %v848
        %v850 = vpop.f32.mrf.mxu0
        %851 = vdwg.mxu0
        %vm852 = vcmask 261120
        %853 = vst.msk [vmem:[%s301] sm:$0xff] %vm852, %v849
        %s854 = sand.u32 %s183, 1
        %s855 = scalar_lea.sflag [#allocation4], %s854
        %s856 = sand.u32 %s183, 1
        %s857 = smul.addr %s856, 8
        %s858 = scalar_lea.vmem [#allocation7], %s857
        // Predicated region
        $region57: #{tpu_custom_call.1} parent=47 // pred_check
          %p859 = pneg %p193
        $region58: #{tpu_custom_call.1} parent=47 // pred_check_branch
          %861 = sbr.rel (%p859) target = $region60
        $region59: #{tpu_custom_call.1} parent=47 // pred_region
          %863 = vsyncadd %s855, 0
          %s864 = smul.addr %s23, 8
          %s865 = scalar_lea.hbm %s7, %s864
          %s867 = sshll.u32 %s858, 4
          %s868 = int_to_ptr.vmem [resolvable:$true] %s867
          %s869 = sshll.u32 %s865, 4
          %s870 = int_to_ptr.hbm [resolvable:$true] %s869
          %872 = dma.vmem_to_hbm [thread:$0]  %s868, 128, %s870, %s855
        $region60: #{tpu_custom_call.1} parent=47 // pred_fallthru
          _
      $region48: #{tpu_custom_call.1} parent=5 // pred_fallthru
        _
      %p873 = scmp.le.s32.totalorder 2, %s18
      // Predicated region
      $region61: #{tpu_custom_call.1} parent=5 // pred_check
        %p874 = pneg %p873
      $region62: #{tpu_custom_call.1} parent=5 // pred_check_branch
        %876 = sbr.rel (%p874) target = $region64
      $region63: #{tpu_custom_call.1} parent=5 // pred_region
        %s877 = ssub.s32 %s18, 2
        // Predicated region
        $region65: #{tpu_custom_call.1} parent=63 // pred_check
          %p878 = pneg %p199
        $region66: #{tpu_custom_call.1} parent=63 // pred_check_branch
          %880 = sbr.rel (%p878) target = $region68
        $region67: #{tpu_custom_call.1} parent=63 // pred_region
          %s881 = sand.u32 %s184, 1
          %s882 = scalar_lea.sflag [#allocation4], %s881
          %s883 = sand.u32 %s184, 1
          %s884 = smul.addr %s883, 8
          %s885 = scalar_lea.vmem [#allocation7], %s884
          %887 = dma.done %s882, 128
        $region68: #{tpu_custom_call.1} parent=63 // pred_fallthru
          _
      $region64: #{tpu_custom_call.1} parent=5 // pred_fallthru
        _
    $region6: #{tpu_custom_call.1} parent=1 // loop_footer
      %s22 = sadd.s32 1, %s18
    $region7: #{tpu_custom_call.1} parent=1 // loop_footer_branch
      %17 = sbr.rel target = $region3
    $region8: #{tpu_custom_call.1} parent=1 // loop_exit
      _
    %888 = vsyncpa [#allocation3], 1
    %s889 = scalar_lea.sflag [#allocation3], 1
    %890 = vsyncpa %s889, 1
    %891 = vsyncpa [#allocation6], 1
    %892 = vsyncpa [#allocation4], 1
    %s893 = scalar_lea.sflag [#allocation4], 1
    %894 = vsyncpa %s893, 1

</llo_original>
